<compile_context>
chip_gen: v7x
topology: tpu7x:2x2x1
jax: 0.10.0
libtpu: 0.0.40
codegen_flags: <defaults>
</compile_context>

<pallas_src>
import math

import jax
import jax.numpy as jnp
from jax.experimental import pallas as pl
from jax.experimental.pallas import tpu as pltpu


def _log_softmax_kernel(x_ref, o_ref):
    # Whole class (reduction) axis is resident in the block -> single pass.
    x = x_ref[...].astype(jnp.float32)
    m = jnp.max(x, axis=-1, keepdims=True)          # XLU
    shifted = x - m                                  # VPU
    lse = jnp.log(jnp.sum(jnp.exp(shifted), axis=-1, keepdims=True))  # EUP+XLU
    o_ref[...] = (shifted - lse).astype(o_ref.dtype)


def _round_up(x, m):
    return (x + m - 1) // m * m


def _choose_row_tile(r, c, block_bytes):
    """Pick the row-tile: ~block_bytes of f32 per block, multiple of 8 rows."""
    row_bytes = c * 4  # f32 compute footprint per row (kernel upcasts)
    tile = max(8, (block_bytes // row_bytes) // 8 * 8)
    # Prefer >=4 grid steps (pipelining + v7x's 2 TensorCores) as long as
    # each block stays >= block_bytes/2 (per-step overhead stays amortized).
    rows_floor = max(8, ((block_bytes // 2) // row_bytes) // 8 * 8)
    quarter = max(8, _round_up(_round_up(r, 4) // 4, 8))
    if quarter >= rows_floor:
        tile = min(tile, quarter)
    if tile >= r:
        tile = r  # single full block; block dims == array dims is always legal
    return tile


def log_softmax_last_dim(x, *, block_bytes=2 << 20):
    """Pallas equivalent of torch.nn.LogSoftmax(dim=-1) for any N-D input."""
    orig_shape = x.shape
    if x.size == 0:
        return x
    c = orig_shape[-1]
    r = math.prod(orig_shape[:-1])

    # --- perf / robustness dispatch guards -------------------------------
    if c < 128 and r * c >= (1 << 20):
        # Large narrow-C inputs under-fill the 128-lane vregs (masked vst,
        # <C/128 lane utilization); XLA's fused log-softmax is faster there.
        # TODO(synk): lane-pack 128//C rows per vreg row with a segmented
        # in-lane reduction to keep this case on the Pallas path.
        return jax.nn.log_softmax(x, axis=-1)
    if c * 4 * 8 > (8 << 20):
        # Vocab-scale class axis: a single resident row would blow VMEM
        # (earliest on v7x's 64 MiB).
        # TODO(synk): online-softmax path with a second 'arbitrary' grid axis
        # over C and running max/sum scratch.
        return jax.nn.log_softmax(x, axis=-1)
    # ---------------------------------------------------------------------

    x2 = x.reshape(r, c)
    tile = _choose_row_tile(r, c, block_bytes)
    grid = (pl.cdiv(r, tile),)  # partial last block; no pad / slice round-trip

    itemsize = int(jnp.dtype(x.dtype).itemsize)
    out2 = pl.pallas_call(
        _log_softmax_kernel,
        out_shape=jax.ShapeDtypeStruct((r, c), x.dtype),
        grid=grid,
        in_specs=[pl.BlockSpec((tile, c), lambda i: (i, 0))],
        out_specs=pl.BlockSpec((tile, c), lambda i: (i, 0)),
        compiler_params=pltpu.CompilerParams(
            dimension_semantics=("parallel",),
            vmem_limit_bytes=40 << 20,
        ),
        cost_estimate=pl.CostEstimate(
            flops=5 * r * c,
            transcendentals=r * c + r,
            bytes_accessed=2 * r * c * itemsize,
        ),
    )(x2)
    return out2.reshape(orig_shape)


if __name__ == "__main__":
    key = jax.random.PRNGKey(0)

    # Spec shape from the PyTorch script: torch.randn(1, 2, 3, 4).
    x = jax.random.normal(key, (1, 2, 3, 4), dtype=jnp.float32)
    y = jax.block_until_ready(log_softmax_last_dim(x))
    ref = jax.nn.log_softmax(x, axis=-1)
    assert y.shape == x.shape and y.dtype == x.dtype
    assert jnp.allclose(y, ref, atol=1e-5, rtol=1e-5), "spec-shape mismatch"

    # Secondary check: lane-dense C=128, multi-block grid with a partial last
    # block (296 rows, tile=80 -> grid=4, tail of 56 valid rows).
    key2 = jax.random.PRNGKey(1)
    x2 = jax.random.normal(key2, (2, 4, 37, 128), dtype=jnp.float32)
    y2 = jax.block_until_ready(log_softmax_last_dim(x2, block_bytes=64 << 10))
    ref2 = jax.nn.log_softmax(x2, axis=-1)
    assert jnp.allclose(y2, ref2, atol=1e-5, rtol=1e-5), "tiled-shape mismatch"

    print("KERNEL_OK")
</pallas_src>

<mosaic_0001>
module attributes {stable_mosaic.version = 11 : i64} {
  func.func @_log_softmax_kernel(%arg0: i32, %arg1: memref<6x4xf32, #tpu.memory_space<vmem>>, %arg2: memref<6x4xf32, #tpu.memory_space<vmem>>) attributes {dimension_semantics = [#tpu.dimension_semantics<parallel>], iteration_bounds = array<i64: 1>, scalar_prefetch = 0 : i64, scratch_operands = 0 : i64, tpu.core_type = #tpu.core_type<tc>, window_params = [{transform_indices = @transform_0, window_bounds = array<i64: 6, 4>}, {transform_indices = @transform_1, window_bounds = array<i64: 6, 4>}]} {
    %c0 = arith.constant 0 : index
    %c0_0 = arith.constant 0 : index
    %0 = vector.load %arg1[%c0, %c0_0] : memref<6x4xf32, #tpu.memory_space<vmem>>, vector<6x4xf32>
    %cst = arith.constant dense<0xFF800000> : vector<6xf32>
    %1 = vector.multi_reduction <maximumf>, %0, %cst [1] : vector<6x4xf32> to vector<6xf32>
    %2 = vector.shape_cast %1 : vector<6xf32> to vector<6x1xf32>
    %3 = vector.broadcast %2 : vector<6x1xf32> to vector<6x4xf32>
    %4 = arith.subf %0, %3 : vector<6x4xf32>
    %5 = math.exp %4 : vector<6x4xf32>
    %cst_1 = arith.constant dense<0.000000e+00> : vector<6xf32>
    %6 = vector.multi_reduction <add>, %5, %cst_1 [1] : vector<6x4xf32> to vector<6xf32>
    %7 = vector.shape_cast %6 : vector<6xf32> to vector<6x1xf32>
    %8 = math.log %7 : vector<6x1xf32>
    %9 = vector.broadcast %8 : vector<6x1xf32> to vector<6x4xf32>
    %10 = arith.subf %4, %9 : vector<6x4xf32>
    %c0_2 = arith.constant 0 : index
    %c0_3 = arith.constant 0 : index
    %11 = vector.load %arg2[%c0_2, %c0_3] : memref<6x4xf32, #tpu.memory_space<vmem>>, vector<6x4xf32>
    tpu.vector_store %arg2[%c0_2, %c0_3], %10 {strides = array<i32>} : memref<6x4xf32, #tpu.memory_space<vmem>>, vector<6x4xf32>,
    return
  }
  func.func @transform_0(%arg0: i32) -> (i32, i32) {
    %c0_i32 = arith.constant 0 : i32
    %c0_i32_0 = arith.constant 0 : i32
    return %arg0, %c0_i32 : i32, i32
  }
  func.func @transform_1(%arg0: i32) -> (i32, i32) {
    %c0_i32 = arith.constant 0 : i32
    %c0_i32_0 = arith.constant 0 : i32
    return %arg0, %c0_i32 : i32, i32
  }
}

</mosaic_0001>

<llo_original>
// kernel: tpu_custom_call.1
$region0: #{tpu_custom_call.1}
  #allocation0 [shape = 'u32[]', space=smem, size = 0x4, offset = 0x4, fixed_abs, tag = 'smem constant byte address 0x4 - core index']
  #allocation1 [shape = 'u32[144,128]{1,0:T(1,128)}', space=vmem, size = 0x12000, scoped, tag = 'internal scratch']
  %s0 = inlined_call_operand.vmem [shape: f32[6,4], index: 0, kind: input, shape index: {}]
  %s1 = inlined_call_operand.vmem [shape: f32[6,4], index: 1, kind: output, shape index: {}]
  %s2 = sld [smem:[#allocation0]]
  $region14: #{tpu_custom_call.1} parent=0
    _
  %s4 = ssub.s32 1, %s2
  %s5 = scalar_select 0, %s4, %s2
  // Predicated region
  $region2: #{tpu_custom_call.1} parent=0 // pred_check
    _
  $region3: #{tpu_custom_call.1} parent=0 // pred_check_branch
    %7 = sbr.rel (0) target = $region5
  $region4: #{tpu_custom_call.1} parent=0 // pred_region
    _
  $region5: #{tpu_custom_call.1} parent=0 // pred_fallthru
    _
  %v8 = vld [vmem:[%s0] sm:$0x3f]
  %vm9 = vcmask 29696
  %v10 = vsel %vm9, %v8, -inf
  %11 = vmax.xlane.f32.xlu0 %v10
  %v12 = vpop.xlane.xlu0 %11
  %v13 = vsub.f32 %v8, %v12
  %v14 = vmul.f32 %v13, 1.442695
  %v15 = vpow.pop %v14
  %v16 = vsel %vm9, %v15, 0.0
  %17 = vadd.xlane.f32.xlu0 %v16
  %v18 = vpop.xlane.xlu0 %17
  %v19 = vlog2.pop %v18
  %v20 = vmul.f32 %v19, 0.6931472
  %v21 = vsub.f32 %v13, %v20
  %22 = vst.msk [vmem:[%s1] sm:$0x3f] %vm9, %v21
  // Predicated region
  $region6: #{tpu_custom_call.1} parent=0 // pred_check
    _
  $region7: #{tpu_custom_call.1} parent=0 // pred_check_branch
    %24 = sbr.rel (0) target = $region9
  $region8: #{tpu_custom_call.1} parent=0 // pred_region
    _
  $region9: #{tpu_custom_call.1} parent=0 // pred_fallthru
    _
  // Predicated region
  $region10: #{tpu_custom_call.1} parent=0 // pred_check
    _
  $region11: #{tpu_custom_call.1} parent=0 // pred_check_branch
    %26 = sbr.rel (0) target = $region13
  $region12: #{tpu_custom_call.1} parent=0 // pred_region
    _
  $region13: #{tpu_custom_call.1} parent=0 // pred_fallthru
    _

</llo_original>
